<compile_context>
chip_gen: v7x
topology: tpu7x:2x2x1
jax: 0.10.0
libtpu: 0.0.40
codegen_flags: <defaults>
</compile_context>

<pallas_src>
import functools

import numpy as np
import jax
import jax.numpy as jnp
from jax import lax
from jax.experimental import pallas as pl
from jax.experimental.pallas import tpu as pltpu

HALF_LOG_2PI = 0.5 * float(np.log(2.0 * np.pi))
HIDDEN = 64           # per-branch hidden width (fixed by the PyTorch module)
LANE = 2 * HIDDEN     # fused width = 128 = one full vreg lane dimension


def _round_up(x, m):
    return ((x + m - 1) // m) * m


def mlp_continuous_kernel(s_ref, eps_ref, w1_ref, b1_ref, w2_ref, b2_ref,
                          w3_ref, b3_ref, log_std_ref, out_ref, *, n_acts):
    """Fused actor+critic forward for one [BT, n_obs] batch tile.

    Output slab layout (lane-dense [BT, 128]):
        lanes [0, n_acts)  -> clamped sampled action a
        lane  n_acts       -> log_p
        lane  n_acts + 1   -> critic value v
        remaining lanes    -> 0
    """
    s = s_ref[...]                                                      # [BT, n_obs]

    # --- three lane-full MXU matmuls (actor & critic fused) ---
    h = jnp.tanh(jnp.dot(s, w1_ref[...],
                         preferred_element_type=jnp.float32) + b1_ref[...])   # [BT, 128]
    h = jnp.tanh(jnp.dot(h, w2_ref[...],
                         preferred_element_type=jnp.float32) + b2_ref[...])   # [BT, 128]
    out3 = (jnp.dot(h, w3_ref[...], preferred_element_type=jnp.float32)
            + b3_ref[...])                                              # [BT, 128]
    # out3 lanes: [0, n_acts) = actor mean, lane n_acts+1 = critic v, rest = 0.

    # --- per-lane constants (batch-independent): hoisted, divide -> reciprocal*mul ---
    log_std = log_std_ref[...]                                          # [1, 128] (zero-padded)
    std = jnp.exp(log_std)
    inv_two_var = pl.reciprocal(2.0 * std * std, approx=False)

    # --- Gaussian sample, clamp, log-density (padded eps lanes are 0) ---
    a = jnp.clip(out3 + std * eps_ref[...], -1.0, 1.0)

    lane = lax.broadcasted_iota(jnp.int32, (1, LANE), 1)
    is_act = lane < n_acts
    is_logp = lane == n_acts
    is_v = lane == (n_acts + 1)

    log_density = -(a - out3) ** 2 * inv_two_var - HALF_LOG_2PI - log_std
    log_p = jnp.sum(jnp.where(is_act, log_density, 0.0),
                    axis=-1, keepdims=True)                             # [BT, 1]

    # --- single lane-dense store: a | log_p | v | zeros ---
    out_ref[...] = (jnp.where(is_act, a, 0.0)
                    + jnp.where(is_logp, log_p, 0.0)
                    + jnp.where(is_v, out3, 0.0))


def fuse_params(params, n_acts):
    """Fuse actor/critic weights into three lane-full (128-wide) operand sets."""
    H = HIDDEN
    w1 = jnp.concatenate([params["mw1"], params["cw1"]], axis=1)        # [n_obs, 128]
    b1 = jnp.concatenate([params["mb1"], params["cb1"]], axis=1)        # [1, 128]

    w2 = jnp.zeros((2 * H, 2 * H), jnp.float32)
    w2 = w2.at[:H, :H].set(params["mw2"]).at[H:, H:].set(params["cw2"])  # blockdiag
    b2 = jnp.concatenate([params["mb2"], params["cb2"]], axis=1)        # [1, 128]

    w3 = jnp.zeros((2 * H, LANE), jnp.float32)
    w3 = w3.at[:H, :n_acts].set(params["mw3"])
    w3 = w3.at[H:, n_acts + 1:n_acts + 2].set(params["cw3"])
    b3 = jnp.zeros((1, LANE), jnp.float32)
    b3 = b3.at[:, :n_acts].set(params["mb3"])
    b3 = b3.at[:, n_acts + 1:n_acts + 2].set(params["cb3"])

    log_std = jnp.zeros((1, LANE), jnp.float32).at[:, :n_acts].set(params["log_std"])
    return w1, b1, w2, b2, w3, b3, log_std


def mlp_continuous_forward(s, eps, params, *, block_b=512):
    """Returns (a, log_p, v) exactly like MLPContinuous.forward(s)."""
    B, n_obs = s.shape
    n_acts = params["mw3"].shape[1]
    assert n_acts + 2 <= LANE, "output slab layout requires n_acts + 2 <= 128"

    w1, b1, w2, b2, w3, b3, log_std = fuse_params(params, n_acts)

    # Batch tiling: BT multiple of 8, batch padded to a multiple of BT.
    bt = min(block_b, _round_up(B, 8))
    b_pad = _round_up(B, bt)
    s_p = jnp.zeros((b_pad, n_obs), jnp.float32).at[:B].set(s)
    eps_p = jnp.zeros((b_pad, LANE), jnp.float32).at[:B, :n_acts].set(eps)

    grid = (b_pad // bt,)

    def row_spec(shape):
        return pl.BlockSpec(shape, lambda i: (i, 0))      # tiled over batch rows

    def fixed_spec(shape):
        return pl.BlockSpec(shape, lambda i: (0, 0))      # resident across grid steps

    out = pl.pallas_call(
        functools.partial(mlp_continuous_kernel, n_acts=n_acts),
        out_shape=jax.ShapeDtypeStruct((b_pad, LANE), jnp.float32),
        grid=grid,
        in_specs=[
            row_spec((bt, n_obs)),               # s
            row_spec((bt, LANE)),                # eps (lane-padded)
            fixed_spec((n_obs, LANE)),           # W1 = [mw1 | cw1]
            fixed_spec((1, LANE)),               # b1
            fixed_spec((2 * HIDDEN, 2 * HIDDEN)),  # W2 = blockdiag(mw2, cw2)
            fixed_spec((1, LANE)),               # b2
            fixed_spec((2 * HIDDEN, LANE)),      # W3 (actor cols | critic col)
            fixed_spec((1, LANE)),               # b3
            fixed_spec((1, LANE)),               # log_std (lane-padded)
        ],
        out_specs=row_spec((bt, LANE)),
        compiler_params=pltpu.CompilerParams(
            dimension_semantics=("parallel",)),  # megacore sharding on v7x
    )(s_p, eps_p, w1, b1, w2, b2, w3, b3, log_std)

    a = out[:B, :n_acts]
    log_p = out[:B, n_acts:n_acts + 1]
    v = out[:B, n_acts + 1:n_acts + 2]
    return a, log_p, v


def init_params(key, n_obs, n_acts, hidden=HIDDEN):
    """Deterministic init mimicking PyTorch nn.Linear default (U(-k, k), k=1/sqrt(fan_in))."""
    def linear(k, fan_in, fan_out):
        kw, kb = jax.random.split(k)
        bound = 1.0 / np.sqrt(fan_in)
        w = jax.random.uniform(kw, (fan_in, fan_out), jnp.float32, -bound, bound)
        b = jax.random.uniform(kb, (1, fan_out), jnp.float32, -bound, bound)
        return w, b

    keys = jax.random.split(key, 6)
    mw1, mb1 = linear(keys[0], n_obs, hidden)
    mw2, mb2 = linear(keys[1], hidden, hidden)
    mw3, mb3 = linear(keys[2], hidden, n_acts)
    cw1, cb1 = linear(keys[3], n_obs, hidden)
    cw2, cb2 = linear(keys[4], hidden, hidden)
    cw3, cb3 = linear(keys[5], hidden, 1)
    return {
        "mw1": mw1, "mb1": mb1, "mw2": mw2, "mb2": mb2, "mw3": mw3, "mb3": mb3,
        "log_std": jnp.zeros((1, n_acts), jnp.float32),
        "cw1": cw1, "cb1": cb1, "cw2": cw2, "cb2": cb2, "cw3": cw3, "cb3": cb3,
    }


def reference_forward(s, eps, p):
    """Pure-JAX reference with identical semantics (unfused weights), for verification."""
    h = jnp.tanh(s @ p["mw1"] + p["mb1"])
    h = jnp.tanh(h @ p["mw2"] + p["mb2"])
    mean = h @ p["mw3"] + p["mb3"]
    log_std = p["log_std"]
    std = jnp.exp(log_std)
    a = jnp.clip(mean + std * eps, -1.0, 1.0)
    log_density = -(a - mean) ** 2 / (2.0 * std * std) - HALF_LOG_2PI - log_std
    log_p = jnp.sum(log_density, axis=-1, keepdims=True)
    hc = jnp.tanh(s @ p["cw1"] + p["cb1"])
    hc = jnp.tanh(hc @ p["cw2"] + p["cb2"])
    v = hc @ p["cw3"] + p["cb3"]
    return a, log_p, v


if __name__ == "__main__":
    n_obs, n_acts = 16, 4
    key = jax.random.PRNGKey(0)
    k_param, k_state, k_noise, k_state2, k_noise2 = jax.random.split(key, 5)
    params = init_params(k_param, n_obs, n_acts)

    # --- small demo shape (grid = 1) ---
    B = 8
    s = jax.random.normal(k_state, (B, n_obs), jnp.float32)
    eps = jax.random.normal(k_noise, (B, n_acts), jnp.float32)
    a, log_p, v = jax.block_until_ready(mlp_continuous_forward(s, eps, params))
    a_r, lp_r, v_r = reference_forward(s, eps, params)
    assert a.shape == (B, n_acts) and log_p.shape == (B, 1) and v.shape == (B, 1)
    np.testing.assert_allclose(np.asarray(a), np.asarray(a_r), rtol=1e-5, atol=1e-5)
    np.testing.assert_allclose(np.asarray(log_p), np.asarray(lp_r), rtol=1e-5, atol=1e-5)
    np.testing.assert_allclose(np.asarray(v), np.asarray(v_r), rtol=1e-5, atol=1e-5)

    # --- exercise multi-step grid + batch padding (B not a multiple of BT) ---
    B2 = 21
    s2 = jax.random.normal(k_state2, (B2, n_obs), jnp.float32)
    eps2 = jax.random.normal(k_noise2, (B2, n_acts), jnp.float32)
    a2, lp2, v2 = jax.block_until_ready(
        mlp_continuous_forward(s2, eps2, params, block_b=8))
    a2_r, lp2_r, v2_r = reference_forward(s2, eps2, params)
    np.testing.assert_allclose(np.asarray(a2), np.asarray(a2_r), rtol=1e-5, atol=1e-5)
    np.testing.assert_allclose(np.asarray(lp2), np.asarray(lp2_r), rtol=1e-5, atol=1e-5)
    np.testing.assert_allclose(np.asarray(v2), np.asarray(v2_r), rtol=1e-5, atol=1e-5)

    print("KERNEL_OK")
</pallas_src>

<mosaic_0001>
module attributes {stable_mosaic.version = 11 : i64} {
  func.func @mlp_continuous_kernel(%arg0: i32, %arg1: memref<8x16xf32, #tpu.memory_space<vmem>>, %arg2: memref<8x128xf32, #tpu.memory_space<vmem>>, %arg3: memref<16x128xf32, #tpu.memory_space<vmem>>, %arg4: memref<1x128xf32, #tpu.memory_space<vmem>>, %arg5: memref<128x128xf32, #tpu.memory_space<vmem>>, %arg6: memref<1x128xf32, #tpu.memory_space<vmem>>, %arg7: memref<128x128xf32, #tpu.memory_space<vmem>>, %arg8: memref<1x128xf32, #tpu.memory_space<vmem>>, %arg9: memref<1x128xf32, #tpu.memory_space<vmem>>, %arg10: memref<8x128xf32, #tpu.memory_space<vmem>>) attributes {dimension_semantics = [#tpu.dimension_semantics<parallel>], iteration_bounds = array<i64: 1>, scalar_prefetch = 0 : i64, scratch_operands = 0 : i64, tpu.core_type = #tpu.core_type<tc>, window_params = [{transform_indices = @transform_0, window_bounds = array<i64: 8, 16>}, {transform_indices = @transform_1, window_bounds = array<i64: 8, 128>}, {pipeline_mode = #tpu.pipeline_mode<synchronous>, transform_indices = @transform_2, window_bounds = array<i64: 16, 128>}, {pipeline_mode = #tpu.pipeline_mode<synchronous>, transform_indices = @transform_3, window_bounds = array<i64: 1, 128>}, {pipeline_mode = #tpu.pipeline_mode<synchronous>, transform_indices = @transform_4, window_bounds = array<i64: 128, 128>}, {pipeline_mode = #tpu.pipeline_mode<synchronous>, transform_indices = @transform_5, window_bounds = array<i64: 1, 128>}, {pipeline_mode = #tpu.pipeline_mode<synchronous>, transform_indices = @transform_6, window_bounds = array<i64: 128, 128>}, {pipeline_mode = #tpu.pipeline_mode<synchronous>, transform_indices = @transform_7, window_bounds = array<i64: 1, 128>}, {pipeline_mode = #tpu.pipeline_mode<synchronous>, transform_indices = @transform_8, window_bounds = array<i64: 1, 128>}, {transform_indices = @transform_9, window_bounds = array<i64: 8, 128>}]} {
    %c0 = arith.constant 0 : index
    %c0_0 = arith.constant 0 : index
    %0 = vector.load %arg1[%c0, %c0_0] : memref<8x16xf32, #tpu.memory_space<vmem>>, vector<8x16xf32>
    %c0_1 = arith.constant 0 : index
    %c0_2 = arith.constant 0 : index
    %1 = vector.load %arg3[%c0_1, %c0_2] : memref<16x128xf32, #tpu.memory_space<vmem>>, vector<16x128xf32>
    %cst = arith.constant dense<0.000000e+00> : vector<8x128xf32>
    %2 = tpu.matmul %0, %1, %cst {dimension_numbers = #tpu.dot_dimension_numbers<[1], [0], [0], [1], [0, 0, 1, 1], [], []>} : vector<8x16xf32>, vector<16x128xf32>, vector<8x128xf32> -> vector<8x128xf32>
    %c0_3 = arith.constant 0 : index
    %c0_4 = arith.constant 0 : index
    %3 = vector.load %arg4[%c0_3, %c0_4] : memref<1x128xf32, #tpu.memory_space<vmem>>, vector<1x128xf32>
    %4 = vector.broadcast %3 : vector<1x128xf32> to vector<8x128xf32>
    %5 = arith.addf %2, %4 : vector<8x128xf32>
    %6 = math.tanh %5 : vector<8x128xf32>
    %c0_5 = arith.constant 0 : index
    %c0_6 = arith.constant 0 : index
    %7 = vector.load %arg5[%c0_5, %c0_6] : memref<128x128xf32, #tpu.memory_space<vmem>>, vector<128x128xf32>
    %cst_7 = arith.constant dense<0.000000e+00> : vector<8x128xf32>
    %8 = tpu.matmul %6, %7, %cst_7 {dimension_numbers = #tpu.dot_dimension_numbers<[1], [0], [0], [1], [0, 0, 1, 1], [], []>} : vector<8x128xf32>, vector<128x128xf32>, vector<8x128xf32> -> vector<8x128xf32>
    %c0_8 = arith.constant 0 : index
    %c0_9 = arith.constant 0 : index
    %9 = vector.load %arg6[%c0_8, %c0_9] : memref<1x128xf32, #tpu.memory_space<vmem>>, vector<1x128xf32>
    %10 = vector.broadcast %9 : vector<1x128xf32> to vector<8x128xf32>
    %11 = arith.addf %8, %10 : vector<8x128xf32>
    %12 = math.tanh %11 : vector<8x128xf32>
    %c0_10 = arith.constant 0 : index
    %c0_11 = arith.constant 0 : index
    %13 = vector.load %arg7[%c0_10, %c0_11] : memref<128x128xf32, #tpu.memory_space<vmem>>, vector<128x128xf32>
    %cst_12 = arith.constant dense<0.000000e+00> : vector<8x128xf32>
    %14 = tpu.matmul %12, %13, %cst_12 {dimension_numbers = #tpu.dot_dimension_numbers<[1], [0], [0], [1], [0, 0, 1, 1], [], []>} : vector<8x128xf32>, vector<128x128xf32>, vector<8x128xf32> -> vector<8x128xf32>
    %c0_13 = arith.constant 0 : index
    %c0_14 = arith.constant 0 : index
    %15 = vector.load %arg8[%c0_13, %c0_14] : memref<1x128xf32, #tpu.memory_space<vmem>>, vector<1x128xf32>
    %16 = vector.broadcast %15 : vector<1x128xf32> to vector<8x128xf32>
    %17 = arith.addf %14, %16 : vector<8x128xf32>
    %c0_15 = arith.constant 0 : index
    %c0_16 = arith.constant 0 : index
    %18 = vector.load %arg9[%c0_15, %c0_16] : memref<1x128xf32, #tpu.memory_space<vmem>>, vector<1x128xf32>
    %19 = math.exp %18 : vector<1x128xf32>
    %cst_17 = arith.constant 2.000000e+00 : f32
    %20 = vector.broadcast %cst_17 : f32 to vector<1x128xf32>
    %21 = arith.mulf %20, %19 : vector<1x128xf32>
    %22 = arith.mulf %21, %19 : vector<1x128xf32>
    %23 = tpu.reciprocal %22 : vector<1x128xf32> -> vector<1x128xf32>
    %c0_18 = arith.constant 0 : index
    %c0_19 = arith.constant 0 : index
    %24 = vector.load %arg2[%c0_18, %c0_19] : memref<8x128xf32, #tpu.memory_space<vmem>>, vector<8x128xf32>
    %25 = vector.broadcast %19 : vector<1x128xf32> to vector<8x128xf32>
    %26 = arith.mulf %25, %24 : vector<8x128xf32>
    %27 = arith.addf %17, %26 : vector<8x128xf32>
    %cst_20 = arith.constant -1.000000e+00 : f32
    %cst_21 = arith.constant 1.000000e+00 : f32
    %28 = vector.broadcast %cst_20 : f32 to vector<8x128xf32>
    %29 = arith.maximumf %28, %27 : vector<8x128xf32>
    %30 = vector.broadcast %cst_21 : f32 to vector<8x128xf32>
    %31 = arith.minimumf %30, %29 : vector<8x128xf32>
    %32 = tpu.iota {dimensions = array<i32: 1>} : vector<1x128xi32>
    %c4_i32 = arith.constant 4 : i32
    %33 = vector.broadcast %c4_i32 : i32 to vector<1x128xi32>
    %34 = arith.cmpi slt, %32, %33 : vector<1x128xi32>
    %c4_i32_22 = arith.constant 4 : i32
    %35 = vector.broadcast %c4_i32_22 : i32 to vector<1x128xi32>
    %36 = arith.cmpi eq, %32, %35 : vector<1x128xi32>
    %c5_i32 = arith.constant 5 : i32
    %37 = vector.broadcast %c5_i32 : i32 to vector<1x128xi32>
    %38 = arith.cmpi eq, %32, %37 : vector<1x128xi32>
    %39 = arith.subf %31, %17 : vector<8x128xf32>
    %40 = arith.mulf %39, %39 : vector<8x128xf32>
    %cst_23 = arith.constant 0.000000e+00 : f32
    %41 = vector.broadcast %cst_23 : f32 to vector<8x128xf32>
    %42 = arith.subf %41, %40 : vector<8x128xf32>
    %43 = vector.broadcast %23 : vector<1x128xf32> to vector<8x128xf32>
    %44 = arith.mulf %42, %43 : vector<8x128xf32>
    %cst_24 = arith.constant 0.918938517 : f32
    %45 = vector.broadcast %cst_24 : f32 to vector<8x128xf32>
    %46 = arith.subf %44, %45 : vector<8x128xf32>
    %47 = vector.broadcast %18 : vector<1x128xf32> to vector<8x128xf32>
    %48 = arith.subf %46, %47 : vector<8x128xf32>
    %cst_25 = arith.constant 0.000000e+00 : f32
    %49 = vector.shape_cast %34 : vector<1x128xi1> to vector<1x128xi1>
    %50 = vector.broadcast %49 : vector<1x128xi1> to vector<8x128xi1>
    %51 = vector.broadcast %cst_25 : f32 to vector<8x128xf32>
    %52 = arith.select %50, %48, %51 : vector<8x128xi1>, vector<8x128xf32>
    %cst_26 = arith.constant dense<0.000000e+00> : vector<8xf32>
    %53 = vector.multi_reduction <add>, %52, %cst_26 [1] : vector<8x128xf32> to vector<8xf32>
    %54 = vector.shape_cast %53 : vector<8xf32> to vector<8x1xf32>
    %cst_27 = arith.constant 0.000000e+00 : f32
    %55 = vector.shape_cast %34 : vector<1x128xi1> to vector<1x128xi1>
    %56 = vector.broadcast %55 : vector<1x128xi1> to vector<8x128xi1>
    %57 = vector.broadcast %cst_27 : f32 to vector<8x128xf32>
    %58 = arith.select %56, %31, %57 : vector<8x128xi1>, vector<8x128xf32>
    %cst_28 = arith.constant 0.000000e+00 : f32
    %59 = vector.shape_cast %36 : vector<1x128xi1> to vector<1x128xi1>
    %60 = vector.broadcast %59 : vector<1x128xi1> to vector<8x128xi1>
    %61 = vector.shape_cast %54 : vector<8x1xf32> to vector<8x1xf32>
    %62 = vector.broadcast %61 : vector<8x1xf32> to vector<8x128xf32>
    %63 = vector.broadcast %cst_28 : f32 to vector<8x128xf32>
    %64 = arith.select %60, %62, %63 : vector<8x128xi1>, vector<8x128xf32>
    %65 = arith.addf %58, %64 : vector<8x128xf32>
    %cst_29 = arith.constant 0.000000e+00 : f32
    %66 = vector.shape_cast %38 : vector<1x128xi1> to vector<1x128xi1>
    %67 = vector.broadcast %66 : vector<1x128xi1> to vector<8x128xi1>
    %68 = vector.broadcast %cst_29 : f32 to vector<8x128xf32>
    %69 = arith.select %67, %17, %68 : vector<8x128xi1>, vector<8x128xf32>
    %70 = arith.addf %65, %69 : vector<8x128xf32>
    %c0_30 = arith.constant 0 : index
    %c0_31 = arith.constant 0 : index
    %71 = vector.load %arg10[%c0_30, %c0_31] : memref<8x128xf32, #tpu.memory_space<vmem>>, vector<8x128xf32>
    tpu.vector_store %arg10[%c0_30, %c0_31], %70 {strides = array<i32>} : memref<8x128xf32, #tpu.memory_space<vmem>>, vector<8x128xf32>,
    return
  }
  func.func @transform_0(%arg0: i32) -> (i32, i32) {
    %c0_i32 = arith.constant 0 : i32
    %c0_i32_0 = arith.constant 0 : i32
    return %arg0, %c0_i32 : i32, i32
  }
  func.func @transform_1(%arg0: i32) -> (i32, i32) {
    %c0_i32 = arith.constant 0 : i32
    %c0_i32_0 = arith.constant 0 : i32
    return %arg0, %c0_i32 : i32, i32
  }
  func.func @transform_2(%arg0: i32) -> (i32, i32) {
    %c0_i32 = arith.constant 0 : i32
    %c0_i32_0 = arith.constant 0 : i32
    %c0_i32_1 = arith.constant 0 : i32
    return %c0_i32, %c0_i32_0 : i32, i32
  }
  func.func @transform_3(%arg0: i32) -> (i32, i32) {
    %c0_i32 = arith.constant 0 : i32
    %c0_i32_0 = arith.constant 0 : i32
    %c0_i32_1 = arith.constant 0 : i32
    return %c0_i32, %c0_i32_0 : i32, i32
  }
  func.func @transform_4(%arg0: i32) -> (i32, i32) {
    %c0_i32 = arith.constant 0 : i32
    %c0_i32_0 = arith.constant 0 : i32
    %c0_i32_1 = arith.constant 0 : i32
    return %c0_i32, %c0_i32_0 : i32, i32
  }
  func.func @transform_5(%arg0: i32) -> (i32, i32) {
    %c0_i32 = arith.constant 0 : i32
    %c0_i32_0 = arith.constant 0 : i32
    %c0_i32_1 = arith.constant 0 : i32
    return %c0_i32, %c0_i32_0 : i32, i32
  }
  func.func @transform_6(%arg0: i32) -> (i32, i32) {
    %c0_i32 = arith.constant 0 : i32
    %c0_i32_0 = arith.constant 0 : i32
    %c0_i32_1 = arith.constant 0 : i32
    return %c0_i32, %c0_i32_0 : i32, i32
  }
  func.func @transform_7(%arg0: i32) -> (i32, i32) {
    %c0_i32 = arith.constant 0 : i32
    %c0_i32_0 = arith.constant 0 : i32
    %c0_i32_1 = arith.constant 0 : i32
    return %c0_i32, %c0_i32_0 : i32, i32
  }
  func.func @transform_8(%arg0: i32) -> (i32, i32) {
    %c0_i32 = arith.constant 0 : i32
    %c0_i32_0 = arith.constant 0 : i32
    %c0_i32_1 = arith.constant 0 : i32
    return %c0_i32, %c0_i32_0 : i32, i32
  }
  func.func @transform_9(%arg0: i32) -> (i32, i32) {
    %c0_i32 = arith.constant 0 : i32
    %c0_i32_0 = arith.constant 0 : i32
    return %arg0, %c0_i32 : i32, i32
  }
}

</mosaic_0001>

<llo_original>
// kernel: tpu_custom_call.1
$region0: #{tpu_custom_call.1}
  #allocation0 [shape = 'u32[]', space=smem, size = 0x4, offset = 0x4, fixed_abs, tag = 'smem constant byte address 0x4 - core index']
  #allocation1 [shape = 'u32[144,128]{1,0:T(1,128)}', space=vmem, size = 0x12000, scoped, tag = 'internal scratch']
  %s0 = inlined_call_operand.hbm [shape: f32[8,16], index: 0, kind: input, shape index: {}]
  %s1 = inlined_call_operand.hbm [shape: f32[8,128], index: 1, kind: input, shape index: {}]
  %s2 = inlined_call_operand.hbm [shape: f32[16,128], index: 2, kind: input, shape index: {}]
  %s3 = inlined_call_operand.vmem [shape: f32[1,128], index: 3, kind: input, shape index: {}]
  %s4 = inlined_call_operand.hbm [shape: f32[128,128], index: 4, kind: input, shape index: {}]
  %s5 = inlined_call_operand.vmem [shape: f32[1,128], index: 5, kind: input, shape index: {}]
  %s6 = inlined_call_operand.hbm [shape: f32[128,128], index: 6, kind: input, shape index: {}]
  %s7 = inlined_call_operand.vmem [shape: f32[1,128], index: 7, kind: input, shape index: {}]
  %s8 = inlined_call_operand.vmem [shape: f32[1,128], index: 8, kind: input, shape index: {}]
  %s9 = inlined_call_operand.hbm [shape: f32[8,128], index: 9, kind: output, shape index: {}]
  %s10 = sld [smem:[#allocation0]]
  $region66: #{tpu_custom_call.1} parent=0
    _
  %s12 = ssub.s32 1, %s10
  %s13 = scalar_select 0, %s12, %s10
  $region1: #{tpu_custom_call.1} parent=0
    #allocation2 [shape = 'u8[4096]{0}', space=vmem, size = 0x1000, scoped, tag = 'input window, operand 0, single buffered']
    #allocation3 [shape = 's32[1]{0}', space=sflag, size = 0x4, scoped, tag = 'scoped memory for tpu_custom_call.1']
    #allocation4 [shape = 's32[1]{0}', space=sflag, size = 0x4, scoped, tag = 'scoped memory for tpu_custom_call.1']
    #allocation5 [shape = 'u8[4096]{0}', space=vmem, size = 0x1000, scoped, tag = 'input window, operand 1, single buffered']
    #allocation6 [shape = 's32[1]{0}', space=sflag, size = 0x4, scoped, tag = 'scoped memory for tpu_custom_call.1']
    #allocation7 [shape = 'u8[8192]{0}', space=vmem, size = 0x2000, scoped, tag = 'input window, operand 2, single buffered']
    #allocation8 [shape = 'u8[65536]{0}', space=vmem, size = 0x10000, scoped, tag = 'input window, operand 4, single buffered']
    #allocation9 [shape = 's32[1]{0}', space=sflag, size = 0x4, scoped, tag = 'scoped memory for tpu_custom_call.1']
    #allocation10 [shape = 'u8[65536]{0}', space=vmem, size = 0x10000, scoped, tag = 'input window, operand 6, single buffered']
    #allocation11 [shape = 'u8[4096]{0}', space=vmem, size = 0x1000, scoped, tag = 'output window, operand 0, single buffered']
    %14 = vsyncpa [#allocation3], 0
    %15 = vsyncpa [#allocation6], 0
    %16 = vsyncpa [#allocation9], 0
    %17 = vsyncpa [#allocation4], 0
    // Predicated region
    $region2: #{tpu_custom_call.1} parent=1 // pred_check
      _
    $region3: #{tpu_custom_call.1} parent=1 // pred_check_branch
      %19 = sbr.rel (0) target = $region5
    $region4: #{tpu_custom_call.1} parent=1 // pred_region
      %s21 = ssub.s32 128, 128
      %22 = vsyncadd [#allocation3], %s21
      %s24 = sshll.u32 [#allocation2], 4
      %s25 = int_to_ptr.vmem [resolvable:$true] %s24
      %27 = dma.hbm_to_vmem [thread:$0]  %s0, 128, %s25, [#allocation3]
    $region5: #{tpu_custom_call.1} parent=1 // pred_fallthru
      _
    // Predicated region
    $region6: #{tpu_custom_call.1} parent=1 // pred_check
      _
    $region7: #{tpu_custom_call.1} parent=1 // pred_check_branch
      %29 = sbr.rel (0) target = $region9
    $region8: #{tpu_custom_call.1} parent=1 // pred_region
      %s31 = ssub.s32 128, 128
      %32 = vsyncadd [#allocation6], %s31
      %s34 = sshll.u32 [#allocation5], 4
      %s35 = int_to_ptr.vmem [resolvable:$true] %s34
      %37 = dma.hbm_to_vmem [thread:$0]  %s1, 128, %s35, [#allocation6]
    $region9: #{tpu_custom_call.1} parent=1 // pred_fallthru
      _
    // Predicated region
    $region10: #{tpu_custom_call.1} parent=1 // pred_check
      _
    $region11: #{tpu_custom_call.1} parent=1 // pred_check_branch
      %39 = sbr.rel (0) target = $region13
    $region12: #{tpu_custom_call.1} parent=1 // pred_region
      %s41 = ssub.s32 256, 256
      %42 = vsyncadd [#allocation6], %s41
      %s43 = sshll.u32 [#allocation7], 4
      %s44 = int_to_ptr.vmem [resolvable:$true] %s43
      %49 = dma.hbm_to_vmem [thread:$0]  %s2, 256, %s44, [#allocation6], 128, 128, 8
    $region13: #{tpu_custom_call.1} parent=1 // pred_fallthru
      _
    // Predicated region
    $region14: #{tpu_custom_call.1} parent=1 // pred_check
      _
    $region15: #{tpu_custom_call.1} parent=1 // pred_check_branch
      %51 = sbr.rel (0) target = $region17
    $region16: #{tpu_custom_call.1} parent=1 // pred_region
      _
    $region17: #{tpu_custom_call.1} parent=1 // pred_fallthru
      _
    // Predicated region
    $region18: #{tpu_custom_call.1} parent=1 // pred_check
      _
    $region19: #{tpu_custom_call.1} parent=1 // pred_check_branch
      %53 = sbr.rel (0) target = $region21
    $region20: #{tpu_custom_call.1} parent=1 // pred_region
      %s55 = ssub.s32 2048, 2048
      %56 = vsyncadd [#allocation9], %s55
      %s57 = sshll.u32 [#allocation8], 4
      %s58 = int_to_ptr.vmem [resolvable:$true] %s57
      %63 = dma.hbm_to_vmem [thread:$0]  %s4, 2048, %s58, [#allocation9], 128, 128, 8
    $region21: #{tpu_custom_call.1} parent=1 // pred_fallthru
      _
    // Predicated region
    $region22: #{tpu_custom_call.1} parent=1 // pred_check
      _
    $region23: #{tpu_custom_call.1} parent=1 // pred_check_branch
      %65 = sbr.rel (0) target = $region25
    $region24: #{tpu_custom_call.1} parent=1 // pred_region
      _
    $region25: #{tpu_custom_call.1} parent=1 // pred_fallthru
      _
    // Predicated region
    $region26: #{tpu_custom_call.1} parent=1 // pred_check
      _
    $region27: #{tpu_custom_call.1} parent=1 // pred_check_branch
      %67 = sbr.rel (0) target = $region29
    $region28: #{tpu_custom_call.1} parent=1 // pred_region
      %s69 = ssub.s32 2048, 2048
      %70 = vsyncadd [#allocation9], %s69
      %s71 = sshll.u32 [#allocation10], 4
      %s72 = int_to_ptr.vmem [resolvable:$true] %s71
      %77 = dma.hbm_to_vmem [thread:$0]  %s6, 2048, %s72, [#allocation9], 128, 128, 8
    $region29: #{tpu_custom_call.1} parent=1 // pred_fallthru
      _
    // Predicated region
    $region30: #{tpu_custom_call.1} parent=1 // pred_check
      _
    $region31: #{tpu_custom_call.1} parent=1 // pred_check_branch
      %79 = sbr.rel (0) target = $region33
    $region32: #{tpu_custom_call.1} parent=1 // pred_region
      _
    $region33: #{tpu_custom_call.1} parent=1 // pred_fallthru
      _
    // Predicated region
    $region34: #{tpu_custom_call.1} parent=1 // pred_check
      _
    $region35: #{tpu_custom_call.1} parent=1 // pred_check_branch
      %81 = sbr.rel (0) target = $region37
    $region36: #{tpu_custom_call.1} parent=1 // pred_region
      _
    $region37: #{tpu_custom_call.1} parent=1 // pred_fallthru
      _
    // Predicated region
    $region38: #{tpu_custom_call.1} parent=1 // pred_check
      _
    $region39: #{tpu_custom_call.1} parent=1 // pred_check_branch
      %83 = sbr.rel (0) target = $region41
    $region40: #{tpu_custom_call.1} parent=1 // pred_region
      %84 = dma.done [#allocation3], 128
    $region41: #{tpu_custom_call.1} parent=1 // pred_fallthru
      _
    // Predicated region
    $region42: #{tpu_custom_call.1} parent=1 // pred_check
      _
    $region43: #{tpu_custom_call.1} parent=1 // pred_check_branch
      %86 = sbr.rel (0) target = $region45
    $region44: #{tpu_custom_call.1} parent=1 // pred_region
      %87 = dma.done [#allocation6], 128
    $region45: #{tpu_custom_call.1} parent=1 // pred_fallthru
      _
    // Predicated region
    $region46: #{tpu_custom_call.1} parent=1 // pred_check
      _
    $region47: #{tpu_custom_call.1} parent=1 // pred_check_branch
      %89 = sbr.rel (0) target = $region49
    $region48: #{tpu_custom_call.1} parent=1 // pred_region
      %90 = dma.done [#allocation6], 256
    $region49: #{tpu_custom_call.1} parent=1 // pred_fallthru
      _
    // Predicated region
    $region50: #{tpu_custom_call.1} parent=1 // pred_check
      _
    $region51: #{tpu_custom_call.1} parent=1 // pred_check_branch
      %92 = sbr.rel (0) target = $region53
    $region52: #{tpu_custom_call.1} parent=1 // pred_region
      %93 = dma.done [#allocation9], 2048
    $region53: #{tpu_custom_call.1} parent=1 // pred_fallthru
      _
    // Predicated region
    $region54: #{tpu_custom_call.1} parent=1 // pred_check
      _
    $region55: #{tpu_custom_call.1} parent=1 // pred_check_branch
      %95 = sbr.rel (0) target = $region57
    $region56: #{tpu_custom_call.1} parent=1 // pred_region
      %96 = dma.done [#allocation9], 2048
    $region57: #{tpu_custom_call.1} parent=1 // pred_fallthru
      _
    %v97 = vld [vmem:[#allocation2] sm:$0xff]
    %v98 = vld [vmem:[#allocation7] sm:$0xff]
    %v99 = vld [vmem:[#allocation7 + $0x8] sm:$0xff]
    %v100 = vld [vmem:[%s3] sm:$0x1]
    %v102 = vlaneseq
    %v103 = vshrl.u32 %v102, 7
    %v104 = vsub.s32 0, %v103
    %v105 = vrot.slane %v100, %v104
    %vm107 = vcmask 130048
    %v109 = vsel %vm107, %v97, 0
    %111 = vmatprep.subr.mxu0 0.0
    %112 = vmatpush1.msra.mxu0 %v98
    %113 = vmatprep.subr.mxu0 0.0
    %114 = vmatpush1.msra.mxu0 %v99
    %115 = vmatprep.subr.mxu0 0.0
    %116 = vmatpush1.msra.mxu0 0.0
    %117 = vmatprep.subr.mxu0 0.0
    %118 = vmatpush1.msra.mxu0 0.0
    %119 = vmatprep.subr.mxu0 0.0
    %120 = vmatpush1.msra.mxu0 0.0
    %121 = vmatprep.subr.mxu0 0.0
    %122 = vmatpush1.msra.mxu0 0.0
    %123 = vmatprep.subr.mxu0 0.0
    %124 = vmatpush1.msra.mxu0 0.0
    %125 = vmatprep.subr.mxu0 0.0
    %126 = vmatpush1.msra.mxu0 0.0
    %127 = vmatprep.subr.mxu0 0.0
    %128 = vmatpush1.msra.mxu0 0.0
    %129 = vmatprep.subr.mxu0 0.0
    %130 = vmatpush1.msra.mxu0 0.0
    %131 = vmatprep.subr.mxu0 0.0
    %132 = vmatpush1.msra.mxu0 0.0
    %133 = vmatprep.subr.mxu0 0.0
    %134 = vmatpush1.msra.mxu0 0.0
    %135 = vmatprep.subr.mxu0 0.0
    %136 = vmatpush1.msra.mxu0 0.0
    %137 = vmatprep.subr.mxu0 0.0
    %138 = vmatpush1.msra.mxu0 0.0
    %139 = vmatprep.subr.mxu0 0.0
    %140 = vmatpush1.msra.mxu0 0.0
    %141 = vmatprep.subr.mxu0 0.0
    %142 = vmatpush1.msra.mxu0 0.0
    %143 = vmatprep.subr.mxu0 0.0
    %144 = vmatpush1.msra.mxu0 0.0
    %145 = vmatprep.subr.mxu0 0.0
    %146 = vmatpush1.msra.mxu0 0.0
    %147 = vmatprep.subr.mxu0 0.0
    %148 = vmatpush1.msra.mxu0 0.0
    %149 = vmatprep.subr.mxu0 0.0
    %150 = vmatpush1.msra.mxu0 0.0
    %151 = vmatprep.subr.mxu0 0.0
    %152 = vmatpush1.msra.mxu0 0.0
    %153 = vmatprep.subr.mxu0 0.0
    %154 = vmatpush1.msra.mxu0 0.0
    %155 = vmatprep.subr.mxu0 0.0
    %156 = vmatpush1.msra.mxu0 0.0
    %157 = vmatprep.subr.mxu0 0.0
    %158 = vmatpush1.msra.mxu0 0.0
    %159 = vmatprep.subr.mxu0 0.0
    %160 = vmatpush1.msra.mxu0 0.0
    %161 = vmatprep.subr.mxu0 0.0
    %162 = vmatpush1.msra.mxu0 0.0
    %163 = vmatprep.subr.mxu0 0.0
    %164 = vmatpush1.msra.mxu0 0.0
    %165 = vmatprep.subr.mxu0 0.0
    %166 = vmatpush1.msra.mxu0 0.0
    %167 = vmatprep.subr.mxu0 0.0
    %168 = vmatpush1.msra.mxu0 0.0
    %169 = vmatprep.subr.mxu0 0.0
    %170 = vmatpush1.msra.mxu0 0.0
    %171 = vmatprep.subr.mxu0 0.0
    %172 = vmatpush1.msra.mxu0 0.0
    %173 = vmatprep.subr.mxu0 0.0
    %174 = vmatpush1.msra.mxu0 0.0
    %175 = vmatprep.mubr.f32.mxu0 0.0
    %176 = vmatmul.mubr.f32.gmra.mrb[0].mxu0 %v109
    %v177 = vpop.f32.mrb[0].mxu0
    %v178 = vadd.f32 %v105, %v177
    %v179 = vpop.f32.mrb[0].mxu0
    %180 = vdwg.mxu0
    %v181 = vtanh.pop %v178
    %v182 = vld [vmem:[#allocation8] sm:$0xff]
    %v183 = vld [vmem:[#allocation8 + $0x8] sm:$0xff]
    %v184 = vld [vmem:[#allocation8 + $0x10] sm:$0xff]
    %v185 = vld [vmem:[#allocation8 + $0x18] sm:$0xff]
    %v186 = vld [vmem:[#allocation8 + $0x20] sm:$0xff]
    %v187 = vld [vmem:[#allocation8 + $0x28] sm:$0xff]
    %v188 = vld [vmem:[#allocation8 + $0x30] sm:$0xff]
    %v189 = vld [vmem:[#allocation8 + $0x38] sm:$0xff]
    %v190 = vld [vmem:[#allocation8 + $0x40] sm:$0xff]
    %v191 = vld [vmem:[#allocation8 + $0x48] sm:$0xff]
    %v192 = vld [vmem:[#allocation8 + $0x50] sm:$0xff]
    %v193 = vld [vmem:[#allocation8 + $0x58] sm:$0xff]
    %v194 = vld [vmem:[#allocation8 + $0x60] sm:$0xff]
    %v195 = vld [vmem:[#allocation8 + $0x68] sm:$0xff]
    %v196 = vld [vmem:[#allocation8 + $0x70] sm:$0xff]
    %v197 = vld [vmem:[#allocation8 + $0x78] sm:$0xff]
    %v198 = vld [vmem:[%s5] sm:$0x1]
    %v200 = vlaneseq
    %v201 = vshrl.u32 %v200, 7
    %v202 = vsub.s32 0, %v201
    %v203 = vrot.slane %v198, %v202
    %205 = vmatprep.subr.mxu0 0.0
    %206 = vmatpush1.msra.mxu0 %v182
    %207 = vmatprep.subr.mxu0 0.0
    %208 = vmatpush1.msra.mxu0 %v183
    %209 = vmatprep.subr.mxu0 0.0
    %210 = vmatpush1.msra.mxu0 %v184
    %211 = vmatprep.subr.mxu0 0.0
    %212 = vmatpush1.msra.mxu0 %v185
    %213 = vmatprep.subr.mxu0 0.0
    %214 = vmatpush1.msra.mxu0 %v186
    %215 = vmatprep.subr.mxu0 0.0
    %216 = vmatpush1.msra.mxu0 %v187
    %217 = vmatprep.subr.mxu0 0.0
    %218 = vmatpush1.msra.mxu0 %v188
    %219 = vmatprep.subr.mxu0 0.0
    %220 = vmatpush1.msra.mxu0 %v189
    %221 = vmatprep.subr.mxu0 0.0
    %222 = vmatpush1.msra.mxu0 %v190
    %223 = vmatprep.subr.mxu0 0.0
    %224 = vmatpush1.msra.mxu0 %v191
    %225 = vmatprep.subr.mxu0 0.0
    %226 = vmatpush1.msra.mxu0 %v192
    %227 = vmatprep.subr.mxu0 0.0
    %228 = vmatpush1.msra.mxu0 %v193
    %229 = vmatprep.subr.mxu0 0.0
    %230 = vmatpush1.msra.mxu0 %v194
    %231 = vmatprep.subr.mxu0 0.0
    %232 = vmatpush1.msra.mxu0 %v195
    %233 = vmatprep.subr.mxu0 0.0
    %234 = vmatpush1.msra.mxu0 %v196
    %235 = vmatprep.subr.mxu0 0.0
    %236 = vmatpush1.msra.mxu0 %v197
    %237 = vmatprep.subr.mxu0 0.0
    %238 = vmatpush1.msra.mxu0 0.0
    %239 = vmatprep.subr.mxu0 0.0
    %240 = vmatpush1.msra.mxu0 0.0
    %241 = vmatprep.subr.mxu0 0.0
    %242 = vmatpush1.msra.mxu0 0.0
    %243 = vmatprep.subr.mxu0 0.0
    %244 = vmatpush1.msra.mxu0 0.0
    %245 = vmatprep.subr.mxu0 0.0
    %246 = vmatpush1.msra.mxu0 0.0
    %247 = vmatprep.subr.mxu0 0.0
    %248 = vmatpush1.msra.mxu0 0.0
    %249 = vmatprep.subr.mxu0 0.0
    %250 = vmatpush1.msra.mxu0 0.0
    %251 = vmatprep.subr.mxu0 0.0
    %252 = vmatpush1.msra.mxu0 0.0
    %253 = vmatprep.subr.mxu0 0.0
    %254 = vmatpush1.msra.mxu0 0.0
    %255 = vmatprep.subr.mxu0 0.0
    %256 = vmatpush1.msra.mxu0 0.0
    %257 = vmatprep.subr.mxu0 0.0
    %258 = vmatpush1.msra.mxu0 0.0
    %259 = vmatprep.subr.mxu0 0.0
    %260 = vmatpush1.msra.mxu0 0.0
    %261 = vmatprep.subr.mxu0 0.0
    %262 = vmatpush1.msra.mxu0 0.0
    %263 = vmatprep.subr.mxu0 0.0
    %264 = vmatpush1.msra.mxu0 0.0
    %265 = vmatprep.subr.mxu0 0.0
    %266 = vmatpush1.msra.mxu0 0.0
    %267 = vmatprep.subr.mxu0 0.0
    %268 = vmatpush1.msra.mxu0 0.0
    %269 = vmatprep.mubr.f32.mxu0 0.0
    %270 = vmatmul.mubr.f32.gmra.mrb[0].mxu0 %v181
    %v271 = vpop.f32.mrb[0].mxu0
    %v272 = vadd.f32 %v203, %v271
    %v273 = vpop.f32.mrb[0].mxu0
    %274 = vdwg.mxu0
    %v275 = vtanh.pop %v272
    %v276 = vld [vmem:[#allocation10] sm:$0xff]
    %v277 = vld [vmem:[#allocation10 + $0x8] sm:$0xff]
    %v278 = vld [vmem:[#allocation10 + $0x10] sm:$0xff]
    %v279 = vld [vmem:[#allocation10 + $0x18] sm:$0xff]
    %v280 = vld [vmem:[#allocation10 + $0x20] sm:$0xff]
    %v281 = vld [vmem:[#allocation10 + $0x28] sm:$0xff]
    %v282 = vld [vmem:[#allocation10 + $0x30] sm:$0xff]
    %v283 = vld [vmem:[#allocation10 + $0x38] sm:$0xff]
    %v284 = vld [vmem:[#allocation10 + $0x40] sm:$0xff]
    %v285 = vld [vmem:[#allocation10 + $0x48] sm:$0xff]
    %v286 = vld [vmem:[#allocation10 + $0x50] sm:$0xff]
    %v287 = vld [vmem:[#allocation10 + $0x58] sm:$0xff]
    %v288 = vld [vmem:[#allocation10 + $0x60] sm:$0xff]
    %v289 = vld [vmem:[#allocation10 + $0x68] sm:$0xff]
    %v290 = vld [vmem:[#allocation10 + $0x70] sm:$0xff]
    %v291 = vld [vmem:[#allocation10 + $0x78] sm:$0xff]
    %v292 = vld [vmem:[%s7] sm:$0x1]
    %v294 = vlaneseq
    %v295 = vshrl.u32 %v294, 7
    %v296 = vsub.s32 0, %v295
    %v297 = vrot.slane %v292, %v296
    %299 = vmatprep.subr.mxu0 0.0
    %300 = vmatpush1.msra.mxu0 %v276
    %301 = vmatprep.subr.mxu0 0.0
    %302 = vmatpush1.msra.mxu0 %v277
    %303 = vmatprep.subr.mxu0 0.0
    %304 = vmatpush1.msra.mxu0 %v278
    %305 = vmatprep.subr.mxu0 0.0
    %306 = vmatpush1.msra.mxu0 %v279
    %307 = vmatprep.subr.mxu0 0.0
    %308 = vmatpush1.msra.mxu0 %v280
    %309 = vmatprep.subr.mxu0 0.0
    %310 = vmatpush1.msra.mxu0 %v281
    %311 = vmatprep.subr.mxu0 0.0
    %312 = vmatpush1.msra.mxu0 %v282
    %313 = vmatprep.subr.mxu0 0.0
    %314 = vmatpush1.msra.mxu0 %v283
    %315 = vmatprep.subr.mxu0 0.0
    %316 = vmatpush1.msra.mxu0 %v284
    %317 = vmatprep.subr.mxu0 0.0
    %318 = vmatpush1.msra.mxu0 %v285
    %319 = vmatprep.subr.mxu0 0.0
    %320 = vmatpush1.msra.mxu0 %v286
    %321 = vmatprep.subr.mxu0 0.0
    %322 = vmatpush1.msra.mxu0 %v287
    %323 = vmatprep.subr.mxu0 0.0
    %324 = vmatpush1.msra.mxu0 %v288
    %325 = vmatprep.subr.mxu0 0.0
    %326 = vmatpush1.msra.mxu0 %v289
    %327 = vmatprep.subr.mxu0 0.0
    %328 = vmatpush1.msra.mxu0 %v290
    %329 = vmatprep.subr.mxu0 0.0
    %330 = vmatpush1.msra.mxu0 %v291
    %331 = vmatprep.subr.mxu0 0.0
    %332 = vmatpush1.msra.mxu0 0.0
    %333 = vmatprep.subr.mxu0 0.0
    %334 = vmatpush1.msra.mxu0 0.0
    %335 = vmatprep.subr.mxu0 0.0
    %336 = vmatpush1.msra.mxu0 0.0
    %337 = vmatprep.subr.mxu0 0.0
    %338 = vmatpush1.msra.mxu0 0.0
    %339 = vmatprep.subr.mxu0 0.0
    %340 = vmatpush1.msra.mxu0 0.0
    %341 = vmatprep.subr.mxu0 0.0
    %342 = vmatpush1.msra.mxu0 0.0
    %343 = vmatprep.subr.mxu0 0.0
    %344 = vmatpush1.msra.mxu0 0.0
    %345 = vmatprep.subr.mxu0 0.0
    %346 = vmatpush1.msra.mxu0 0.0
    %347 = vmatprep.subr.mxu0 0.0
    %348 = vmatpush1.msra.mxu0 0.0
    %349 = vmatprep.subr.mxu0 0.0
    %350 = vmatpush1.msra.mxu0 0.0
    %351 = vmatprep.subr.mxu0 0.0
    %352 = vmatpush1.msra.mxu0 0.0
    %353 = vmatprep.subr.mxu0 0.0
    %354 = vmatpush1.msra.mxu0 0.0
    %355 = vmatprep.subr.mxu0 0.0
    %356 = vmatpush1.msra.mxu0 0.0
    %357 = vmatprep.subr.mxu0 0.0
    %358 = vmatpush1.msra.mxu0 0.0
    %359 = vmatprep.subr.mxu0 0.0
    %360 = vmatpush1.msra.mxu0 0.0
    %361 = vmatprep.subr.mxu0 0.0
    %362 = vmatpush1.msra.mxu0 0.0
    %363 = vmatprep.mubr.f32.mxu0 0.0
    %364 = vmatmul.mubr.f32.gmra.mrb[0].mxu0 %v275
    %v365 = vpop.f32.mrb[0].mxu0
    %v366 = vadd.f32 %v297, %v365
    %v367 = vpop.f32.mrb[0].mxu0
    %368 = vdwg.mxu0
    %v369 = vld [vmem:[%s8] sm:$0x1]
    %v370 = vmul.f32 %v369, 1.442695
    %v371 = vpow.pop %v370
    %v372 = vmul.f32 %v371, 2.0
    %v373 = vmul.f32 %v372, %v371
    %v374 = vrcp.pop %v373
    %v375 = vld [vmem:[#allocation5] sm:$0xff]
    %v377 = vlaneseq
    %v378 = vshrl.u32 %v377, 7
    %v379 = vsub.s32 0, %v378
    %v380 = vrot.slane %v371, %v379
    %v382 = vmul.f32 %v380, %v375
    %v383 = vadd.f32 %v366, %v382
    %v384 = vmax.f32 %v383, -1.0
    %v385 = vmin.f32 %v384, 1.0
    %v386 = vlaneseq
    %v387 = vand.u32 %v386, 127
    %vm388 = vcmp.lt.s32.totalorder %v387, 4
    %vm389 = vcmp.eq.s32.totalorder %v387, 4
    %vm390 = vcmp.eq.s32.totalorder %v387, 5
    %v391 = vsub.f32 %v385, %v366
    %v392 = vmul.f32 %v391, %v391
    %v393 = vsub.f32 0.0, %v392
    %v395 = vlaneseq
    %v396 = vshrl.u32 %v395, 7
    %v397 = vsub.s32 0, %v396
    %v398 = vrot.slane %v374, %v397
    %v400 = vmul.f32 %v393, %v398
    %v401 = vsub.f32 %v400, 0.9189385
    %v403 = vlaneseq
    %v404 = vshrl.u32 %v403, 7
    %v405 = vsub.s32 0, %v404
    %v406 = vrot.slane %v369, %v405
    %v408 = vsub.f32 %v401, %v406
    %v409 = vsel %vm388, 1, 0
    %vm410 = vcmp.eq.s32.totalorder %v409, 1
    %v411 = vsel %vm410, %v408, 0.0
    %412 = vadd.xlane.f32.xlu0 %v411
    %v413 = vpop.xlane.xlu0 %412
    %v414 = vsel %vm410, %v385, 0.0
    %v415 = vsel %vm389, 1, 0
    %vm416 = vcmp.eq.s32.totalorder %v415, 1
    %v417 = vsel %vm416, %v413, 0.0
    %v418 = vadd.f32 %v414, %v417
    %v419 = vsel %vm390, 1, 0
    %vm420 = vcmp.eq.s32.totalorder %v419, 1
    %v421 = vsel %vm420, %v366, 0.0
    %v422 = vadd.f32 %v418, %v421
    %423 = vst [vmem:[#allocation11] sm:$0xff] %v422
    // Predicated region
    $region58: #{tpu_custom_call.1} parent=1 // pred_check
      _
    $region59: #{tpu_custom_call.1} parent=1 // pred_check_branch
      %425 = sbr.rel (0) target = $region61
    $region60: #{tpu_custom_call.1} parent=1 // pred_region
      %s427 = ssub.s32 128, 128
      %428 = vsyncadd [#allocation4], %s427
      %s430 = sshll.u32 [#allocation11], 4
      %s431 = int_to_ptr.vmem [resolvable:$true] %s430
      %433 = dma.vmem_to_hbm [thread:$0]  %s431, 128, %s9, [#allocation4]
    $region61: #{tpu_custom_call.1} parent=1 // pred_fallthru
      _
    // Predicated region
    $region62: #{tpu_custom_call.1} parent=1 // pred_check
      _
    $region63: #{tpu_custom_call.1} parent=1 // pred_check_branch
      %435 = sbr.rel (0) target = $region65
    $region64: #{tpu_custom_call.1} parent=1 // pred_region
      %436 = dma.done [#allocation4], 128
    $region65: #{tpu_custom_call.1} parent=1 // pred_fallthru
      _
    %437 = vsyncpa [#allocation3], 1
    %438 = vsyncpa [#allocation6], 1
    %439 = vsyncpa [#allocation9], 1
    %440 = vsyncpa [#allocation4], 1

</llo_original>
